<compile_context>
chip_gen: v7x
topology: tpu7x:2x2x1
jax: 0.10.0
libtpu: 0.0.40
codegen_flags: <defaults>
</compile_context>

<pallas_src>
import functools

import jax
import jax.numpy as jnp
from jax.experimental import pallas as pl
from jax.experimental.pallas import tpu as pltpu

# ----------------------------- config ---------------------------------------
FEATURE_DIM = 4      # C
DICT_SIZE   = 32     # number of dictionary atoms
SPARSE_DIM  = 16     # K (sparse code dim) -> sparse_dim < dict_size branch
NUM_STEPS   = 5
THRESH      = 0.1
# Max lane-axis (H*W) tile per grid step.  Per-step working set is only
# ~(C + K) * tn * 4 bytes * 2 buffers ~= 2.6 MB at tn = 16384, far below the
# scoped-VMEM limit on v5e/v6e/v7x, so take the biggest tile we reasonably can.
LANE_TILE   = 16384  # multiple of 512


def _round_up(n, m):
    return ((n + m - 1) // m) * m


def _tensorcores_per_chip():
    """Best-effort detection of chips that shard 'parallel' grid axes across
    multiple TensorCores (v7x).  v5e/v6e have a single TC per chip."""
    try:
        kind = jax.devices()[0].device_kind.lower()
    except Exception:
        return 1
    return 2 if "v7" in kind else 1


def _choose_lane_tile(hw, batch, max_tile, n_cores):
    """Largest lane tile (multiple of 256, filling MXU result columns) up to
    max_tile.  Only on multi-TensorCore chips do we shrink the tile so that
    the grid product divides the core count (keeps both TCs busy); on
    single-TC chips shrinking would only add per-step overhead."""
    tn = min(max_tile, _round_up(hw, 256))
    if n_cores > 1:
        while tn >= 512 and tn % 512 == 0 and \
                (batch * pl.cdiv(hw, tn)) % n_cores != 0:
            tn //= 2
    return tn


# --------------------------- Pallas kernel ----------------------------------
def _lista_kernel(thresh_ref, x_ref, w_ref, s_ref, z_ref, *, num_steps):
    """One (C, TN) lane-dense column tile through the unrolled LISTA iteration.

    thresh_ref: (1,)    SMEM   learnable soft threshold (runtime scalar)
    x_ref:      (C, TN) VMEM   input features (lane-dense)
    w_ref:      (K, C)  VMEM   W_eff = (I - S) @ W
    s_ref:      (K, K)  VMEM   S_eff = I - S
    z_ref:      (K, TN) VMEM   output sparse codes (lane-dense stores)
    """
    t = thresh_ref[0]
    x = x_ref[...]
    w = w_ref[...]
    s = s_ref[...]

    # Original recurrence:  z <- soft((I - S)(z + W x))
    # Folded form:          z <- soft(S_eff @ z + W_eff @ x)
    # W_eff @ x is identical every iteration -> compute once.
    wx = jnp.dot(w, x, preferred_element_type=jnp.float32)        # (K, TN)

    # First iteration (z_0 = 0) is just soft(wx).
    # Soft threshold: sign(z)*relu(|z| - t) == z - clip(z, -t, t)  (3 VALU ops)
    z = wx - jnp.clip(wx, -t, t)
    for _ in range(num_steps - 1):
        z = jnp.dot(s, z, preferred_element_type=jnp.float32) + wx
        z = z - jnp.clip(z, -t, t)

    z_ref[...] = z.astype(z_ref.dtype)


# ----------------------------- wrapper ---------------------------------------
def lista_forward(x, dictionary, W, S, thresh, *, num_steps=NUM_STEPS,
                  lane_tile=LANE_TILE, mxu_dtype=None):
    """x: [B, C, H, W] -> (z [B, K, H, W], dict_norm [dict_size, C]).

    mxu_dtype: optionally cast the data-heavy MXU operands (x, W_eff) to e.g.
    jnp.bfloat16 on v6e/v7x to avoid multi-pass f32 MXU emulation.  Elementwise
    math and the stored z stay f32.  Off by default (tight-tolerance demo).
    """
    assert num_steps >= 1
    B, C, H, W_sp = x.shape
    K = W.shape[0]
    HW = H * W_sp

    # Natural layout, no data movement: [B, C, H, W] -> [B, C, H*W].
    x_bcn = x.reshape(B, C, HW)

    n_cores = _tensorcores_per_chip()
    tn = _choose_lane_tile(HW, B, lane_tile, n_cores)
    hw_pad = _round_up(HW, tn)
    if hw_pad != HW:
        x_bcn = jnp.pad(x_bcn, ((0, 0), (0, 0), (0, hw_pad - HW)))
    grid = (B, hw_pad // tn)

    # Fold (I - S) into the weights on the host (16x16 / 16x4: free), dropping
    # one full-width (K, TN) add + subtract per iteration inside the kernel.
    S_eff = jnp.eye(K, dtype=S.dtype) - S
    W_eff = S_eff @ W
    if mxu_dtype is not None:
        # TODO(synk): the S_eff @ z dot stays f32 (z is kept f32 for accuracy);
        # casting z per step would be needed for a fully-bf16 MXU path.
        x_bcn = x_bcn.astype(mxu_dtype)
        W_eff = W_eff.astype(mxu_dtype)

    # thresh is a learnable parameter: pass it as a runtime SMEM scalar so
    # parameter updates do not trigger recompilation.
    thresh_arr = jnp.asarray(thresh, jnp.float32).reshape((1,))

    # Advisory cost estimate for XLA's scheduler.
    n_rows = B * hw_pad
    flops = 2 * n_rows * (K * C + (num_steps - 1) * K * K) \
        + 3 * n_rows * K * num_steps                      # clip soft-threshold
    bytes_accessed = (n_rows * C * jnp.dtype(x_bcn.dtype).itemsize
                      + n_rows * K * jnp.dtype(x.dtype).itemsize
                      + (K * C + K * K) * 4)
    cost = pl.CostEstimate(flops=int(flops), transcendentals=0,
                           bytes_accessed=int(bytes_accessed))

    # TODO(synk): downstream consumers tolerating bf16 could take z in bf16 to
    # halve the dominant writeback stream (change out_shape dtype).
    z_bkn = pl.pallas_call(
        functools.partial(_lista_kernel, num_steps=num_steps),
        out_shape=jax.ShapeDtypeStruct((B, K, hw_pad), x.dtype),
        grid=grid,
        in_specs=[
            pl.BlockSpec(memory_space=pltpu.MemorySpace.SMEM),     # thresh
            pl.BlockSpec((None, C, tn), lambda b, n: (b, 0, n)),   # x tile
            pl.BlockSpec((K, C), lambda b, n: (0, 0)),             # W_eff
            pl.BlockSpec((K, K), lambda b, n: (0, 0)),             # S_eff
        ],
        out_specs=pl.BlockSpec((None, K, tn), lambda b, n: (b, 0, n)),
        compiler_params=pltpu.CompilerParams(
            dimension_semantics=("parallel", "parallel"),
            vmem_limit_bytes=32 * 1024 * 1024),
        cost_estimate=cost,
    )(thresh_arr, x_bcn, W_eff, S_eff)

    # [B, K, HW_pad] -> [B, K, H, W] (slice + free reshape, no transpose).
    z = z_bkn[:, :, :HW].reshape(B, K, H, W_sp)

    # Tiny (32, 4) row-normalize: plain jnp, XLA fuses it; a separate Pallas
    # launch + DMA for 512 bytes would cost far more than the compute.
    dict_norm = dictionary / jnp.maximum(
        jnp.linalg.norm(dictionary, axis=1, keepdims=True), 1e-12)

    return z, dict_norm


# --------------------------- parameter init ----------------------------------
def init_params(key, feature_dim, dict_size, sparse_dim, thresh=THRESH):
    """Deterministic replica of LISTASparseEncoder._init_params."""
    k_dict, k_proj = jax.random.split(key)
    D = jax.random.normal(k_dict, (dict_size, feature_dim), jnp.float32)
    D = D / jnp.maximum(
        jnp.linalg.norm(D, axis=1, keepdims=True), 1e-12)           # F.normalize

    if sparse_dim == dict_size:
        base = D
        G = D @ D.T
    elif sparse_dim < dict_size:
        base = D[:sparse_dim]
        G = base @ base.T
    else:
        proj = jax.random.normal(k_proj, (sparse_dim, dict_size), jnp.float32)
        proj = proj / jnp.maximum(
            jnp.linalg.norm(proj, axis=1, keepdims=True), 1e-12)
        base = proj @ D
        G = base @ base.T

    L = 1.1 * jnp.linalg.norm(G, ord=2)        # largest singular value
    W = base / L
    S = jnp.eye(sparse_dim, dtype=jnp.float32) - G / L
    return D, W, S, jnp.asarray(thresh, jnp.float32)


# ------------------------------- reference -----------------------------------
def reference_forward(x, dictionary, W, S, thresh, num_steps=NUM_STEPS):
    B, C, H, W_sp = x.shape
    K = W.shape[0]
    x_flat = jnp.transpose(x, (0, 2, 3, 1)).reshape(-1, C)
    z = jnp.zeros((x_flat.shape[0], K), x.dtype)
    for _ in range(num_steps):
        z = z + x_flat @ W.T
        z = z - z @ S.T
        z = jnp.sign(z) * jnp.maximum(jnp.abs(z) - thresh, 0.0)
    z = z.reshape(B, H * W_sp, K).transpose(0, 2, 1).reshape(B, K, H, W_sp)
    dict_norm = dictionary / jnp.maximum(
        jnp.linalg.norm(dictionary, axis=1, keepdims=True), 1e-12)
    return z, dict_norm


# --------------------------------- main ---------------------------------------
if __name__ == "__main__":
    key = jax.random.PRNGKey(0)
    k_param, k_x = jax.random.split(key)

    D, W, S, thresh = init_params(k_param, FEATURE_DIM, DICT_SIZE, SPARSE_DIM)

    B, C, H, Wd = 2, FEATURE_DIM, 16, 16
    x = jax.random.normal(k_x, (B, C, H, Wd), jnp.float32)

    z, dict_norm = lista_forward(x, D, W, S, thresh)
    z = jax.block_until_ready(z)
    dict_norm = jax.block_until_ready(dict_norm)

    z_ref, dict_norm_ref = reference_forward(x, D, W, S, thresh)
    assert z.shape == (B, SPARSE_DIM, H, Wd)
    assert dict_norm.shape == (DICT_SIZE, FEATURE_DIM)
    # Tolerance loosened slightly vs 1e-5: the (I - S) folding reassociates the
    # per-step fp arithmetic relative to the reference.
    assert jnp.allclose(z, z_ref, atol=1e-4, rtol=1e-4), \
        float(jnp.max(jnp.abs(z - z_ref)))
    assert jnp.allclose(dict_norm, dict_norm_ref, atol=1e-6, rtol=1e-6)

    print("KERNEL_OK")
</pallas_src>

<mosaic_0001>
module attributes {stable_mosaic.version = 11 : i64} {
  func.func @_lista_kernel(%arg0: i32, %arg1: i32, %arg2: memref<1xf32, #tpu.memory_space<smem>>, %arg3: memref<1x4x256xf32, #tpu.memory_space<vmem>>, %arg4: memref<16x4xf32, #tpu.memory_space<vmem>>, %arg5: memref<16x16xf32, #tpu.memory_space<vmem>>, %arg6: memref<1x16x256xf32, #tpu.memory_space<vmem>>) attributes {dimension_semantics = [#tpu.dimension_semantics<parallel>, #tpu.dimension_semantics<parallel>], iteration_bounds = array<i64: 2, 1>, scalar_prefetch = 0 : i64, scratch_operands = 0 : i64, tpu.core_type = #tpu.core_type<tc>, window_params = [{transform_indices = @transform_0, window_bounds = array<i64: 1>}, {transform_indices = @transform_1, window_bounds = array<i64: 1, 4, 256>}, {pipeline_mode = #tpu.pipeline_mode<synchronous>, transform_indices = @transform_2, window_bounds = array<i64: 16, 4>}, {pipeline_mode = #tpu.pipeline_mode<synchronous>, transform_indices = @transform_3, window_bounds = array<i64: 16, 16>}, {transform_indices = @transform_4, window_bounds = array<i64: 1, 16, 256>}]} {
    %c0 = arith.constant 0 : index
    %0 = memref.load %arg2[%c0] : memref<1xf32, #tpu.memory_space<smem>>
    %c0_0 = arith.constant 0 : index
    %c0_1 = arith.constant 0 : index
    %c0_2 = arith.constant 0 : index
    %1 = vector.load %arg3[%c0_0, %c0_1, %c0_2] : memref<1x4x256xf32, #tpu.memory_space<vmem>>, vector<1x4x256xf32>
    %2 = vector.shape_cast %1 : vector<1x4x256xf32> to vector<4x256xf32>
    %c0_3 = arith.constant 0 : index
    %c0_4 = arith.constant 0 : index
    %3 = vector.load %arg4[%c0_3, %c0_4] : memref<16x4xf32, #tpu.memory_space<vmem>>, vector<16x4xf32>
    %c0_5 = arith.constant 0 : index
    %c0_6 = arith.constant 0 : index
    %4 = vector.load %arg5[%c0_5, %c0_6] : memref<16x16xf32, #tpu.memory_space<vmem>>, vector<16x16xf32>
    %cst = arith.constant dense<0.000000e+00> : vector<16x256xf32>
    %5 = tpu.matmul %3, %2, %cst {dimension_numbers = #tpu.dot_dimension_numbers<[1], [0], [0], [1], [0, 0, 1, 1], [], []>} : vector<16x4xf32>, vector<4x256xf32>, vector<16x256xf32> -> vector<16x256xf32>
    %cst_7 = arith.constant 0.000000e+00 : f32
    %6 = arith.subf %cst_7, %0 : f32
    %7 = vector.broadcast %6 : f32 to vector<16x256xf32>
    %8 = arith.maximumf %7, %5 : vector<16x256xf32>
    %9 = vector.broadcast %0 : f32 to vector<16x256xf32>
    %10 = arith.minimumf %9, %8 : vector<16x256xf32>
    %11 = arith.subf %5, %10 : vector<16x256xf32>
    %cst_8 = arith.constant dense<0.000000e+00> : vector<16x256xf32>
    %12 = tpu.matmul %4, %11, %cst_8 {dimension_numbers = #tpu.dot_dimension_numbers<[1], [0], [0], [1], [0, 0, 1, 1], [], []>} : vector<16x16xf32>, vector<16x256xf32>, vector<16x256xf32> -> vector<16x256xf32>
    %13 = arith.addf %12, %5 : vector<16x256xf32>
    %cst_9 = arith.constant 0.000000e+00 : f32
    %14 = arith.subf %cst_9, %0 : f32
    %15 = vector.broadcast %14 : f32 to vector<16x256xf32>
    %16 = arith.maximumf %15, %13 : vector<16x256xf32>
    %17 = vector.broadcast %0 : f32 to vector<16x256xf32>
    %18 = arith.minimumf %17, %16 : vector<16x256xf32>
    %19 = arith.subf %13, %18 : vector<16x256xf32>
    %cst_10 = arith.constant dense<0.000000e+00> : vector<16x256xf32>
    %20 = tpu.matmul %4, %19, %cst_10 {dimension_numbers = #tpu.dot_dimension_numbers<[1], [0], [0], [1], [0, 0, 1, 1], [], []>} : vector<16x16xf32>, vector<16x256xf32>, vector<16x256xf32> -> vector<16x256xf32>
    %21 = arith.addf %20, %5 : vector<16x256xf32>
    %cst_11 = arith.constant 0.000000e+00 : f32
    %22 = arith.subf %cst_11, %0 : f32
    %23 = vector.broadcast %22 : f32 to vector<16x256xf32>
    %24 = arith.maximumf %23, %21 : vector<16x256xf32>
    %25 = vector.broadcast %0 : f32 to vector<16x256xf32>
    %26 = arith.minimumf %25, %24 : vector<16x256xf32>
    %27 = arith.subf %21, %26 : vector<16x256xf32>
    %cst_12 = arith.constant dense<0.000000e+00> : vector<16x256xf32>
    %28 = tpu.matmul %4, %27, %cst_12 {dimension_numbers = #tpu.dot_dimension_numbers<[1], [0], [0], [1], [0, 0, 1, 1], [], []>} : vector<16x16xf32>, vector<16x256xf32>, vector<16x256xf32> -> vector<16x256xf32>
    %29 = arith.addf %28, %5 : vector<16x256xf32>
    %cst_13 = arith.constant 0.000000e+00 : f32
    %30 = arith.subf %cst_13, %0 : f32
    %31 = vector.broadcast %30 : f32 to vector<16x256xf32>
    %32 = arith.maximumf %31, %29 : vector<16x256xf32>
    %33 = vector.broadcast %0 : f32 to vector<16x256xf32>
    %34 = arith.minimumf %33, %32 : vector<16x256xf32>
    %35 = arith.subf %29, %34 : vector<16x256xf32>
    %cst_14 = arith.constant dense<0.000000e+00> : vector<16x256xf32>
    %36 = tpu.matmul %4, %35, %cst_14 {dimension_numbers = #tpu.dot_dimension_numbers<[1], [0], [0], [1], [0, 0, 1, 1], [], []>} : vector<16x16xf32>, vector<16x256xf32>, vector<16x256xf32> -> vector<16x256xf32>
    %37 = arith.addf %36, %5 : vector<16x256xf32>
    %cst_15 = arith.constant 0.000000e+00 : f32
    %38 = arith.subf %cst_15, %0 : f32
    %39 = vector.broadcast %38 : f32 to vector<16x256xf32>
    %40 = arith.maximumf %39, %37 : vector<16x256xf32>
    %41 = vector.broadcast %0 : f32 to vector<16x256xf32>
    %42 = arith.minimumf %41, %40 : vector<16x256xf32>
    %43 = arith.subf %37, %42 : vector<16x256xf32>
    %c0_16 = arith.constant 0 : index
    %c0_17 = arith.constant 0 : index
    %c0_18 = arith.constant 0 : index
    %44 = vector.load %arg6[%c0_16, %c0_17, %c0_18] : memref<1x16x256xf32, #tpu.memory_space<vmem>>, vector<1x16x256xf32>
    %45 = vector.shape_cast %44 : vector<1x16x256xf32> to vector<16x256xf32>
    %46 = vector.shape_cast %43 : vector<16x256xf32> to vector<1x16x256xf32>
    tpu.vector_store %arg6[%c0_16, %c0_17, %c0_18], %46 {strides = array<i32>} : memref<1x16x256xf32, #tpu.memory_space<vmem>>, vector<1x16x256xf32>,
    return
  }
  func.func @transform_0(%arg0: i32, %arg1: i32) -> i32 {
    %c0_i32 = arith.constant 0 : i32
    %c0_i32_0 = arith.constant 0 : i32
    return %c0_i32 : i32
  }
  func.func @transform_1(%arg0: i32, %arg1: i32) -> (i32, i32, i32) {
    %c0_i32 = arith.constant 0 : i32
    %c0_i32_0 = arith.constant 0 : i32
    return %arg0, %c0_i32, %arg1 : i32, i32, i32
  }
  func.func @transform_2(%arg0: i32, %arg1: i32) -> (i32, i32) {
    %c0_i32 = arith.constant 0 : i32
    %c0_i32_0 = arith.constant 0 : i32
    %c0_i32_1 = arith.constant 0 : i32
    return %c0_i32, %c0_i32_0 : i32, i32
  }
  func.func @transform_3(%arg0: i32, %arg1: i32) -> (i32, i32) {
    %c0_i32 = arith.constant 0 : i32
    %c0_i32_0 = arith.constant 0 : i32
    %c0_i32_1 = arith.constant 0 : i32
    return %c0_i32, %c0_i32_0 : i32, i32
  }
  func.func @transform_4(%arg0: i32, %arg1: i32) -> (i32, i32, i32) {
    %c0_i32 = arith.constant 0 : i32
    %c0_i32_0 = arith.constant 0 : i32
    return %arg0, %c0_i32, %arg1 : i32, i32, i32
  }
}

</mosaic_0001>

<llo_original>
// kernel: tpu_custom_call.1
$region0: #{tpu_custom_call.1}
  #allocation0 [shape = 'u32[]', space=smem, size = 0x4, offset = 0x4, fixed_abs, tag = 'smem constant byte address 0x4 - core index']
  #allocation1 [shape = 'u32[144,128]{1,0:T(1,128)}', space=vmem, size = 0x12000, scoped, tag = 'internal scratch']
  #allocation2 [shape = 'f32[1]{0:T(128)S(6)}', space=smem, size = 0x200, scoped, tag = 'scoped memory for tpu_custom_call.1']
  %s0 = inlined_call_operand.<no memory space> [shape: f32[1], index: 0, kind: input, shape index: {}]
  %s1 = inlined_call_operand.vmem [shape: f32[2,4,256], index: 1, kind: input, shape index: {}]
  %s2 = inlined_call_operand.vmem [shape: f32[16,4], index: 2, kind: input, shape index: {}]
  %s3 = inlined_call_operand.hbm [shape: f32[16,16], index: 3, kind: input, shape index: {}]
  %s4 = inlined_call_operand.hbm [shape: f32[2,16,256], index: 4, kind: output, shape index: {}]
  %s5 = sld [smem:[#allocation0]]
  $region53: #{tpu_custom_call.1} parent=0
    _
  %s7 = ssub.s32 1, %s5
  %s8 = scalar_select 0, %s7, %s5
  %9 = sst [smem:[#allocation2]] %s0
  $region1: #{tpu_custom_call.1} parent=0
    #allocation3 [shape = 'u8[8192]{0}', space=vmem, size = 0x2000, scoped, tag = 'input window, operand 3, single buffered']
    #allocation4 [shape = 's32[2]{0}', space=sflag, size = 0x8, scoped, tag = 'scoped memory for tpu_custom_call.1']
    #allocation5 [shape = 's32[2]{0}', space=sflag, size = 0x8, scoped, tag = 'scoped memory for tpu_custom_call.1']
    #allocation6 [shape = 'u8[32768]{0}', space=vmem, size = 0x8000, scoped, tag = 'output window, operand 0']
    %10 = vsyncpa [#allocation4], 0
    %11 = vsyncpa [#allocation5], 0
    %s12 = scalar_lea.sflag [#allocation5], 1
    %13 = vsyncpa %s12, 0
    loop: start=0, step=1, limit=4
    $region2: #{tpu_custom_call.1} parent=1 // loop_pre_header
      _
    $region3: #{tpu_custom_call.1} parent=1 // loop_header
      %s15 = sphi 0, %s19
      %p16 = scmp.ge.s32.totalorder %s15, 4
      %s22 = sphi 0, %s34
      %s23 = sphi 0, %s30
      %s24 = sphi 0, %s22
      %s25 = sphi 0, %s23
      %s26 = sphi 0, %s24
      %s27 = sphi 0, %s25
      %s35 = sphi 0, %s35
      %s37 = sphi 0, %s35
      %s38 = sphi 0, %s37
      %s52 = sphi 0, %s38
      %s60 = sphi 0, %s62
      %s63 = sphi 0, %s60
      %s64 = sphi 0, %s63
      %s80 = sphi 0, %s64
      %s84 = sphi 0, %s84
      %s86 = sphi 0, %s84
      %s87 = sphi 0, %s86
      %s101 = sphi 0, %s87
      %s105 = sphi 0, %s105
      %s107 = sphi 0, %s105
      %s108 = sphi 0, %s107
      %s122 = sphi 0, %s108
      %s130 = sphi 0, %s132
      %s133 = sphi 0, %s130
      %s134 = sphi 0, %s133
      %s150 = sphi 0, %s134
    $region4: #{tpu_custom_call.1} parent=1 // loop_header_branch
      %18 = sbr.rel (%p16) target = $region8
    $region5: #{tpu_custom_call.1} parent=1 // loop_body
      %s20 = ssub.s32 %s15, 1
      %s21 = ssub.s32 %s15, 2
      %s28 = sadd.s32 1, %s23
      %p29 = scmp.ge.s32.totalorder %s28, 1
      %s30 = scalar_select %p29, 0, %s28
      %s31 = sadd.s32 1, %s22
      %s32 = scalar_select %p29, %s31, %s22
      %p33 = scmp.ge.s32.totalorder %s32, 2
      %s34 = scalar_select %p33, 0, %s32
      %s36 = sadd.s32 %s35, 1
      %p39 = scmp.eq.s32.totalorder %s15, 1
      %p40 = scmp.ne.s32.totalorder %s35, %s37
      %p41 = scmp.eq.s32.totalorder %s15, 0
      %p42 = por %p40, %p41
      %p43 = scmp.ne.s32.totalorder %s35, %s37
      %p44 = scmp.eq.s32.totalorder %s20, 1
      %p45 = por %p43, %p44
      %p46 = scmp.ne.s32.totalorder %s37, %s38
      %p47 = scmp.eq.s32.totalorder %s20, 0
      %p48 = por %p46, %p47
      %p49 = scmp.ne.s32.totalorder %s37, %s38
      %p50 = scmp.eq.s32.totalorder %s21, 1
      %p51 = por %p49, %p50
      %p53 = scmp.ne.s32.totalorder %s38, %s52
      %p54 = scmp.eq.s32.totalorder %s21, 0
      %p55 = por %p53, %p54
      %s56 = ssub.s32 %s22, %s34
      %s57 = ssub.s32 %s23, %s30
      %s58 = sor.u32 %s56, %s57
      %p59 = scmp.eq.s32.totalorder %s58, 0
      %s61 = sadd.s32 %s60, 1
      %s62 = scalar_select %p59, %s60, %s61
      %p65 = pneg %p59
      %p66 = scmp.eq.s32.totalorder %s15, 1
      %p67 = por %p65, %p66
      %p68 = scmp.ne.s32.totalorder %s60, %s63
      %p69 = scmp.eq.s32.totalorder %s15, 0
      %p70 = por %p68, %p69
      %p71 = scmp.ne.s32.totalorder %s60, %s63
      %p72 = scmp.eq.s32.totalorder %s20, 1
      %p73 = por %p71, %p72
      %p74 = scmp.ne.s32.totalorder %s63, %s64
      %p75 = scmp.eq.s32.totalorder %s20, 0
      %p76 = por %p74, %p75
      %p77 = scmp.ne.s32.totalorder %s63, %s64
      %p78 = scmp.eq.s32.totalorder %s21, 1
      %p79 = por %p77, %p78
      %p81 = scmp.ne.s32.totalorder %s64, %s80
      %p82 = scmp.eq.s32.totalorder %s21, 0
      %p83 = por %p81, %p82
      %s85 = sadd.s32 %s84, 1
      %p88 = scmp.eq.s32.totalorder %s15, 1
      %p89 = scmp.ne.s32.totalorder %s84, %s86
      %p90 = scmp.eq.s32.totalorder %s15, 0
      %p91 = por %p89, %p90
      %p92 = scmp.ne.s32.totalorder %s84, %s86
      %p93 = scmp.eq.s32.totalorder %s20, 1
      %p94 = por %p92, %p93
      %p95 = scmp.ne.s32.totalorder %s86, %s87
      %p96 = scmp.eq.s32.totalorder %s20, 0
      %p97 = por %p95, %p96
      %p98 = scmp.ne.s32.totalorder %s86, %s87
      %p99 = scmp.eq.s32.totalorder %s21, 1
      %p100 = por %p98, %p99
      %p102 = scmp.ne.s32.totalorder %s87, %s101
      %p103 = scmp.eq.s32.totalorder %s21, 0
      %p104 = por %p102, %p103
      %s106 = sadd.s32 %s105, 1
      %p109 = scmp.eq.s32.totalorder %s15, 1
      %p110 = scmp.ne.s32.totalorder %s105, %s107
      %p111 = scmp.eq.s32.totalorder %s15, 0
      %p112 = por %p110, %p111
      %p113 = scmp.ne.s32.totalorder %s105, %s107
      %p114 = scmp.eq.s32.totalorder %s20, 1
      %p115 = por %p113, %p114
      %p116 = scmp.ne.s32.totalorder %s107, %s108
      %p117 = scmp.eq.s32.totalorder %s20, 0
      %p118 = por %p116, %p117
      %p119 = scmp.ne.s32.totalorder %s107, %s108
      %p120 = scmp.eq.s32.totalorder %s21, 1
      %p121 = por %p119, %p120
      %p123 = scmp.ne.s32.totalorder %s108, %s122
      %p124 = scmp.eq.s32.totalorder %s21, 0
      %p125 = por %p123, %p124
      %s126 = ssub.s32 %s22, %s34
      %s127 = ssub.s32 %s23, %s30
      %s128 = sor.u32 %s126, %s127
      %p129 = scmp.eq.s32.totalorder %s128, 0
      %s131 = sadd.s32 %s130, 1
      %s132 = scalar_select %p129, %s130, %s131
      %p135 = pneg %p129
      %p136 = scmp.eq.s32.totalorder %s15, 1
      %p137 = por %p135, %p136
      %p138 = scmp.ne.s32.totalorder %s130, %s133
      %p139 = scmp.eq.s32.totalorder %s15, 0
      %p140 = por %p138, %p139
      %p141 = scmp.ne.s32.totalorder %s130, %s133
      %p142 = scmp.eq.s32.totalorder %s20, 1
      %p143 = por %p141, %p142
      %p144 = scmp.ne.s32.totalorder %s133, %s134
      %p145 = scmp.eq.s32.totalorder %s20, 0
      %p146 = por %p144, %p145
      %p147 = scmp.ne.s32.totalorder %s133, %s134
      %p148 = scmp.eq.s32.totalorder %s21, 1
      %p149 = por %p147, %p148
      %p151 = scmp.ne.s32.totalorder %s134, %s150
      %p152 = scmp.eq.s32.totalorder %s21, 0
      %p153 = por %p151, %p152
      %p154 = scmp.le.s32.totalorder 1, %s15
      %p155 = scmp.lt.s32.totalorder %s15, 3
      %p156 = pnand %p154, %p155
      %p157 = pneg %p156
      // Predicated region
      $region9: #{tpu_custom_call.1} parent=5 // pred_check
        _
      $region10: #{tpu_custom_call.1} parent=5 // pred_check_branch
        %159 = sbr.rel (%p156) target = $region12
      $region11: #{tpu_custom_call.1} parent=5 // pred_region
        %s160 = ssub.s32 %s15, 1
        // Predicated region
        $region13: #{tpu_custom_call.1} parent=11 // pred_check
          %p161 = pneg %p48
        $region14: #{tpu_custom_call.1} parent=11 // pred_check_branch
          %163 = sbr.rel (%p161) target = $region16
        $region15: #{tpu_custom_call.1} parent=11 // pred_region
          _
        $region16: #{tpu_custom_call.1} parent=11 // pred_fallthru
          _
        // Predicated region
        $region17: #{tpu_custom_call.1} parent=11 // pred_check
          %p164 = pneg %p97
        $region18: #{tpu_custom_call.1} parent=11 // pred_check_branch
          %166 = sbr.rel (%p164) target = $region20
        $region19: #{tpu_custom_call.1} parent=11 // pred_region
          _
        $region20: #{tpu_custom_call.1} parent=11 // pred_fallthru
          _
        // Predicated region
        $region21: #{tpu_custom_call.1} parent=11 // pred_check
          %p167 = pneg %p118
        $region22: #{tpu_custom_call.1} parent=11 // pred_check_branch
          %169 = sbr.rel (%p167) target = $region24
        $region23: #{tpu_custom_call.1} parent=11 // pred_region
          %s171 = ssub.s32 256, 256
          %172 = vsyncadd [#allocation4], %s171
          %s173 = sshll.u32 [#allocation3], 4
          %s174 = int_to_ptr.vmem [resolvable:$true] %s173
          %179 = dma.hbm_to_vmem [thread:$0]  %s3, 256, %s174, [#allocation4], 128, 128, 8
        $region24: #{tpu_custom_call.1} parent=11 // pred_fallthru
          _
      $region12: #{tpu_custom_call.1} parent=5 // pred_fallthru
        _
      %p180 = scmp.lt.s32.totalorder %s15, 2
      // Predicated region
      $region25: #{tpu_custom_call.1} parent=5 // pred_check
        %p181 = pneg %p180
      $region26: #{tpu_custom_call.1} parent=5 // pred_check_branch
        %183 = sbr.rel (%p181) target = $region28
      $region27: #{tpu_custom_call.1} parent=5 // pred_region
        // Predicated region
        $region29: #{tpu_custom_call.1} parent=27 // pred_check
          %p184 = pneg %p70
        $region30: #{tpu_custom_call.1} parent=27 // pred_check_branch
          %186 = sbr.rel (%p184) target = $region32
        $region31: #{tpu_custom_call.1} parent=27 // pred_region
          %s187 = smul.u32 2, %s23
          %p188 = scmp.lt.s32.totalorder %s22, 1
          %s189 = scalar_select %p188, %s22, 1
          %p190 = scmp.lt.s32.totalorder %s187, 1
          %s191 = scalar_select %p190, %s187, 1
          %s192 = smul.addr %s189, 2
          %s193 = sadd.s32 %s191, %s192
          %s194 = smul.addr %s193, 4
          %s195 = scalar_lea.vmem %s1, %s194
          %s196 = smul.u32 2, %s23
        $region32: #{tpu_custom_call.1} parent=27 // pred_fallthru
          _
      $region28: #{tpu_custom_call.1} parent=5 // pred_fallthru
        _
      %p197 = scmp.le.s32.totalorder 1, %s15
      %p198 = scmp.lt.s32.totalorder %s15, 3
      %p199 = pnand %p197, %p198
      %p200 = pneg %p199
      // Predicated region
      $region33: #{tpu_custom_call.1} parent=5 // pred_check
        _
      $region34: #{tpu_custom_call.1} parent=5 // pred_check_branch
        %202 = sbr.rel (%p199) target = $region36
      $region35: #{tpu_custom_call.1} parent=5 // pred_region
        %s203 = ssub.s32 %s15, 1
        // Predicated region
        $region37: #{tpu_custom_call.1} parent=35 // pred_check
          %p204 = pneg %p118
        $region38: #{tpu_custom_call.1} parent=35 // pred_check_branch
          %206 = sbr.rel (%p204) target = $region40
        $region39: #{tpu_custom_call.1} parent=35 // pred_region
          %207 = dma.done [#allocation4], 256
        $region40: #{tpu_custom_call.1} parent=35 // pred_fallthru
          _
        %p208 = pneg %p48
        %p209 = pneg %p45
        %s210 = smul.u32 2, %s25
        %p211 = scmp.lt.s32.totalorder %s24, 1
        %s212 = scalar_select %p211, %s24, 1
        %p213 = scmp.lt.s32.totalorder %s210, 1
        %s214 = scalar_select %p213, %s210, 1
        %s215 = smul.addr %s212, 2
        %s216 = sadd.s32 %s214, %s215
        %s217 = smul.addr %s216, 4
        %s218 = scalar_lea.vmem %s1, %s217
        %p219 = pneg %p76
        %p220 = pneg %p73
        %p221 = pneg %p97
        %p222 = pneg %p94
        %p223 = pneg %p118
        %p224 = pneg %p115
        %p225 = pneg %p146
        %p226 = pneg %p143
        %s227 = sand.u32 %s133, 1
        %s228 = scalar_lea.sflag [#allocation5], %s227
        %s229 = sand.u32 %s133, 1
        %s230 = smul.addr %s229, 32
        %s231 = scalar_lea.vmem [#allocation6], %s230
        %s232 = smul.u32 2, %s25
        %p233 = scmp.lt.s32.totalorder %s24, 1
        %s234 = scalar_select %p233, %s24, 1
        %p235 = scmp.lt.s32.totalorder %s232, 1
        %s236 = scalar_select %p235, %s232, 1
        %s237 = smul.addr %s234, 2
        %s238 = sadd.s32 %s236, %s237
        %s239 = smul.addr %s238, 4
        %s240 = scalar_lea.vmem %s1, %s239
        %s241 = smul.u32 2, %s25
        %s242 = smul.u32 2, %s25
        %s243 = sld [smem:[#allocation2]]
        %v244 = vld [vmem:[%s240] sm:$0xff]
        %v245 = vld [vmem:[%s2] sm:$0xff]
        %v246 = vld [vmem:[%s2 + $0x8] sm:$0xff]
        %v247 = vld [vmem:[#allocation3] sm:$0xff]
        %v248 = vld [vmem:[#allocation3 + $0x8] sm:$0xff]
        %v250 = vcombine.high %v244, %v244
        %vm251 = vcmask 31744
        %v253 = vsel %vm251, %v245, 0
        %v256 = vsel %vm251, %v246, 0
        %vm258 = vcmask 1043456
        %v259 = vsel %vm258, %v244, 0
        %v261 = vsel %vm258, %v250, 0
        %263 = vmatprep.subr.mxu0 %v261
        %264 = vmatpush1.msra.mxu0 %v259
        %265 = vmatprep.subr.mxu0 0.0
        %266 = vmatpush1.msra.mxu0 0.0
        %267 = vmatprep.subr.mxu0 0.0
        %268 = vmatpush1.msra.mxu0 0.0
        %269 = vmatprep.subr.mxu0 0.0
        %270 = vmatpush1.msra.mxu0 0.0
        %271 = vmatprep.subr.mxu0 0.0
        %272 = vmatpush1.msra.mxu0 0.0
        %273 = vmatprep.subr.mxu0 0.0
        %274 = vmatpush1.msra.mxu0 0.0
        %275 = vmatprep.subr.mxu0 0.0
        %276 = vmatpush1.msra.mxu0 0.0
        %277 = vmatprep.subr.mxu0 0.0
        %278 = vmatpush1.msra.mxu0 0.0
        %279 = vmatprep.subr.mxu0 0.0
        %280 = vmatpush1.msra.mxu0 0.0
        %281 = vmatprep.subr.mxu0 0.0
        %282 = vmatpush1.msra.mxu0 0.0
        %283 = vmatprep.subr.mxu0 0.0
        %284 = vmatpush1.msra.mxu0 0.0
        %285 = vmatprep.subr.mxu0 0.0
        %286 = vmatpush1.msra.mxu0 0.0
        %287 = vmatprep.subr.mxu0 0.0
        %288 = vmatpush1.msra.mxu0 0.0
        %289 = vmatprep.subr.mxu0 0.0
        %290 = vmatpush1.msra.mxu0 0.0
        %291 = vmatprep.subr.mxu0 0.0
        %292 = vmatpush1.msra.mxu0 0.0
        %293 = vmatprep.subr.mxu0 0.0
        %294 = vmatpush1.msra.mxu0 0.0
        %295 = vmatprep.subr.mxu0 0.0
        %296 = vmatpush1.msra.mxu0 0.0
        %297 = vmatprep.subr.mxu0 0.0
        %298 = vmatpush1.msra.mxu0 0.0
        %299 = vmatprep.subr.mxu0 0.0
        %300 = vmatpush1.msra.mxu0 0.0
        %301 = vmatprep.subr.mxu0 0.0
        %302 = vmatpush1.msra.mxu0 0.0
        %303 = vmatprep.subr.mxu0 0.0
        %304 = vmatpush1.msra.mxu0 0.0
        %305 = vmatprep.subr.mxu0 0.0
        %306 = vmatpush1.msra.mxu0 0.0
        %307 = vmatprep.subr.mxu0 0.0
        %308 = vmatpush1.msra.mxu0 0.0
        %309 = vmatprep.subr.mxu0 0.0
        %310 = vmatpush1.msra.mxu0 0.0
        %311 = vmatprep.subr.mxu0 0.0
        %312 = vmatpush1.msra.mxu0 0.0
        %313 = vmatprep.subr.mxu0 0.0
        %314 = vmatpush1.msra.mxu0 0.0
        %315 = vmatprep.subr.mxu0 0.0
        %316 = vmatpush1.msra.mxu0 0.0
        %317 = vmatprep.subr.mxu0 0.0
        %318 = vmatpush1.msra.mxu0 0.0
        %319 = vmatprep.subr.mxu0 0.0
        %320 = vmatpush1.msra.mxu0 0.0
        %321 = vmatprep.subr.mxu0 0.0
        %322 = vmatpush1.msra.mxu0 0.0
        %323 = vmatprep.subr.mxu0 0.0
        %324 = vmatpush1.msra.mxu0 0.0
        %325 = vmatprep.subr.mxu0 0.0
        %326 = vmatpush1.msra.mxu0 0.0
        %327 = vmatprep.mubr.f32.mxu0 0.0
        %328 = vmatmul.mubr.f32.gmra.mrb[0].mxu0 %v253
        %v329 = vpop.f32.mrb[0].mxu0
        %v330 = vadd.f32 0.0, %v329
        %v331 = vpop.f32.mrb[0].mxu0
        %v332 = vadd.f32 0.0, %v331
        %333 = vmatprep.mubr.f32.mxu0 0.0
        %334 = vmatmul.mubr.f32.gmra.mrb[0].mxu0 %v256
        %v335 = vpop.f32.mrb[0].mxu0
        %v336 = vadd.f32 0.0, %v335
        %v337 = vpop.f32.mrb[0].mxu0
        %v338 = vadd.f32 0.0, %v337
        %339 = vdwg.mxu0
        %s340 = ssub.f32 0.0, %s243
        %v341 = vstv %s340
        %v342 = vmax.f32 %v341, %v330
        %v343 = vmax.f32 %v341, %v332
        %v344 = vmax.f32 %v341, %v336
        %v345 = vmax.f32 %v341, %v338
        %v346 = vstv %s243
        %v347 = vmin.f32 %v346, %v342
        %v348 = vmin.f32 %v346, %v343
        %v349 = vmin.f32 %v346, %v344
        %v350 = vmin.f32 %v346, %v345
        %v351 = vsub.f32 %v330, %v347
        %v352 = vsub.f32 %v332, %v348
        %v353 = vsub.f32 %v336, %v349
        %v354 = vsub.f32 %v338, %v350
        %vm355 = vcmask 130048
        %v357 = vsel %vm355, %v247, 0
        %v360 = vsel %vm355, %v248, 0
        %362 = vmatprep.subr.mxu0 %v352
        %363 = vmatpush1.msra.mxu0 %v351
        %364 = vmatprep.subr.mxu0 %v354
        %365 = vmatpush1.msra.mxu0 %v353
        %366 = vmatprep.subr.mxu0 0.0
        %367 = vmatpush1.msra.mxu0 0.0
        %368 = vmatprep.subr.mxu0 0.0
        %369 = vmatpush1.msra.mxu0 0.0
        %370 = vmatprep.subr.mxu0 0.0
        %371 = vmatpush1.msra.mxu0 0.0
        %372 = vmatprep.subr.mxu0 0.0
        %373 = vmatpush1.msra.mxu0 0.0
        %374 = vmatprep.subr.mxu0 0.0
        %375 = vmatpush1.msra.mxu0 0.0
        %376 = vmatprep.subr.mxu0 0.0
        %377 = vmatpush1.msra.mxu0 0.0
        %378 = vmatprep.subr.mxu0 0.0
        %379 = vmatpush1.msra.mxu0 0.0
        %380 = vmatprep.subr.mxu0 0.0
        %381 = vmatpush1.msra.mxu0 0.0
        %382 = vmatprep.subr.mxu0 0.0
        %383 = vmatpush1.msra.mxu0 0.0
        %384 = vmatprep.subr.mxu0 0.0
        %385 = vmatpush1.msra.mxu0 0.0
        %386 = vmatprep.subr.mxu0 0.0
        %387 = vmatpush1.msra.mxu0 0.0
        %388 = vmatprep.subr.mxu0 0.0
        %389 = vmatpush1.msra.mxu0 0.0
        %390 = vmatprep.subr.mxu0 0.0
        %391 = vmatpush1.msra.mxu0 0.0
        %392 = vmatprep.subr.mxu0 0.0
        %393 = vmatpush1.msra.mxu0 0.0
        %394 = vmatprep.subr.mxu0 0.0
        %395 = vmatpush1.msra.mxu0 0.0
        %396 = vmatprep.subr.mxu0 0.0
        %397 = vmatpush1.msra.mxu0 0.0
        %398 = vmatprep.subr.mxu0 0.0
        %399 = vmatpush1.msra.mxu0 0.0
        %400 = vmatprep.subr.mxu0 0.0
        %401 = vmatpush1.msra.mxu0 0.0
        %402 = vmatprep.subr.mxu0 0.0
        %403 = vmatpush1.msra.mxu0 0.0
        %404 = vmatprep.subr.mxu0 0.0
        %405 = vmatpush1.msra.mxu0 0.0
        %406 = vmatprep.subr.mxu0 0.0
        %407 = vmatpush1.msra.mxu0 0.0
        %408 = vmatprep.subr.mxu0 0.0
        %409 = vmatpush1.msra.mxu0 0.0
        %410 = vmatprep.subr.mxu0 0.0
        %411 = vmatpush1.msra.mxu0 0.0
        %412 = vmatprep.subr.mxu0 0.0
        %413 = vmatpush1.msra.mxu0 0.0
        %414 = vmatprep.subr.mxu0 0.0
        %415 = vmatpush1.msra.mxu0 0.0
        %416 = vmatprep.subr.mxu0 0.0
        %417 = vmatpush1.msra.mxu0 0.0
        %418 = vmatprep.subr.mxu0 0.0
        %419 = vmatpush1.msra.mxu0 0.0
        %420 = vmatprep.subr.mxu0 0.0
        %421 = vmatpush1.msra.mxu0 0.0
        %422 = vmatprep.subr.mxu0 0.0
        %423 = vmatpush1.msra.mxu0 0.0
        %424 = vmatprep.subr.mxu0 0.0
        %425 = vmatpush1.msra.mxu0 0.0
        %426 = vmatprep.mubr.f32.mxu0 0.0
        %427 = vmatmul.mubr.f32.gmra.mrb[0].mxu0 %v357
        %v428 = vpop.f32.mrb[0].mxu0
        %v429 = vadd.f32 %v330, %v428
        %v430 = vpop.f32.mrb[0].mxu0
        %v431 = vadd.f32 %v332, %v430
        %432 = vmatprep.mubr.f32.mxu0 0.0
        %433 = vmatmul.mubr.f32.gmra.mrb[0].mxu0 %v360
        %v434 = vpop.f32.mrb[0].mxu0
        %v435 = vadd.f32 %v336, %v434
        %v436 = vpop.f32.mrb[0].mxu0
        %v437 = vadd.f32 %v338, %v436
        %438 = vdwg.mxu0
        %v439 = vmax.f32 %v341, %v429
        %v440 = vmax.f32 %v341, %v431
        %v441 = vmax.f32 %v341, %v435
        %v442 = vmax.f32 %v341, %v437
        %v443 = vmin.f32 %v346, %v439
        %v444 = vmin.f32 %v346, %v440
        %v445 = vmin.f32 %v346, %v441
        %v446 = vmin.f32 %v346, %v442
        %v447 = vsub.f32 %v429, %v443
        %v448 = vsub.f32 %v431, %v444
        %v449 = vsub.f32 %v435, %v445
        %v450 = vsub.f32 %v437, %v446
        %451 = vmatprep.subr.mxu0 %v448
        %452 = vmatpush1.msra.mxu0 %v447
        %453 = vmatprep.subr.mxu0 %v450
        %454 = vmatpush1.msra.mxu0 %v449
        %455 = vmatprep.subr.mxu0 0.0
        %456 = vmatpush1.msra.mxu0 0.0
        %457 = vmatprep.subr.mxu0 0.0
        %458 = vmatpush1.msra.mxu0 0.0
        %459 = vmatprep.subr.mxu0 0.0
        %460 = vmatpush1.msra.mxu0 0.0
        %461 = vmatprep.subr.mxu0 0.0
        %462 = vmatpush1.msra.mxu0 0.0
        %463 = vmatprep.subr.mxu0 0.0
        %464 = vmatpush1.msra.mxu0 0.0
        %465 = vmatprep.subr.mxu0 0.0
        %466 = vmatpush1.msra.mxu0 0.0
        %467 = vmatprep.subr.mxu0 0.0
        %468 = vmatpush1.msra.mxu0 0.0
        %469 = vmatprep.subr.mxu0 0.0
        %470 = vmatpush1.msra.mxu0 0.0
        %471 = vmatprep.subr.mxu0 0.0
        %472 = vmatpush1.msra.mxu0 0.0
        %473 = vmatprep.subr.mxu0 0.0
        %474 = vmatpush1.msra.mxu0 0.0
        %475 = vmatprep.subr.mxu0 0.0
        %476 = vmatpush1.msra.mxu0 0.0
        %477 = vmatprep.subr.mxu0 0.0
        %478 = vmatpush1.msra.mxu0 0.0
        %479 = vmatprep.subr.mxu0 0.0
        %480 = vmatpush1.msra.mxu0 0.0
        %481 = vmatprep.subr.mxu0 0.0
        %482 = vmatpush1.msra.mxu0 0.0
        %483 = vmatprep.subr.mxu0 0.0
        %484 = vmatpush1.msra.mxu0 0.0
        %485 = vmatprep.subr.mxu0 0.0
        %486 = vmatpush1.msra.mxu0 0.0
        %487 = vmatprep.subr.mxu0 0.0
        %488 = vmatpush1.msra.mxu0 0.0
        %489 = vmatprep.subr.mxu0 0.0
        %490 = vmatpush1.msra.mxu0 0.0
        %491 = vmatprep.subr.mxu0 0.0
        %492 = vmatpush1.msra.mxu0 0.0
        %493 = vmatprep.subr.mxu0 0.0
        %494 = vmatpush1.msra.mxu0 0.0
        %495 = vmatprep.subr.mxu0 0.0
        %496 = vmatpush1.msra.mxu0 0.0
        %497 = vmatprep.subr.mxu0 0.0
        %498 = vmatpush1.msra.mxu0 0.0
        %499 = vmatprep.subr.mxu0 0.0
        %500 = vmatpush1.msra.mxu0 0.0
        %501 = vmatprep.subr.mxu0 0.0
        %502 = vmatpush1.msra.mxu0 0.0
        %503 = vmatprep.subr.mxu0 0.0
        %504 = vmatpush1.msra.mxu0 0.0
        %505 = vmatprep.subr.mxu0 0.0
        %506 = vmatpush1.msra.mxu0 0.0
        %507 = vmatprep.subr.mxu0 0.0
        %508 = vmatpush1.msra.mxu0 0.0
        %509 = vmatprep.subr.mxu0 0.0
        %510 = vmatpush1.msra.mxu0 0.0
        %511 = vmatprep.subr.mxu0 0.0
        %512 = vmatpush1.msra.mxu0 0.0
        %513 = vmatprep.subr.mxu0 0.0
        %514 = vmatpush1.msra.mxu0 0.0
        %515 = vmatprep.mubr.f32.mxu0 0.0
        %516 = vmatmul.mubr.f32.gmra.mrb[0].mxu0 %v357
        %v517 = vpop.f32.mrb[0].mxu0
        %v518 = vadd.f32 %v330, %v517
        %v519 = vpop.f32.mrb[0].mxu0
        %v520 = vadd.f32 %v332, %v519
        %521 = vmatprep.mubr.f32.mxu0 0.0
        %522 = vmatmul.mubr.f32.gmra.mrb[0].mxu0 %v360
        %v523 = vpop.f32.mrb[0].mxu0
        %v524 = vadd.f32 %v336, %v523
        %v525 = vpop.f32.mrb[0].mxu0
        %v526 = vadd.f32 %v338, %v525
        %527 = vdwg.mxu0
        %v528 = vmax.f32 %v341, %v518
        %v529 = vmax.f32 %v341, %v520
        %v530 = vmax.f32 %v341, %v524
        %v531 = vmax.f32 %v341, %v526
        %v532 = vmin.f32 %v346, %v528
        %v533 = vmin.f32 %v346, %v529
        %v534 = vmin.f32 %v346, %v530
        %v535 = vmin.f32 %v346, %v531
        %v536 = vsub.f32 %v518, %v532
        %v537 = vsub.f32 %v520, %v533
        %v538 = vsub.f32 %v524, %v534
        %v539 = vsub.f32 %v526, %v535
        %540 = vmatprep.subr.mxu0 %v537
        %541 = vmatpush1.msra.mxu0 %v536
        %542 = vmatprep.subr.mxu0 %v539
        %543 = vmatpush1.msra.mxu0 %v538
        %544 = vmatprep.subr.mxu0 0.0
        %545 = vmatpush1.msra.mxu0 0.0
        %546 = vmatprep.subr.mxu0 0.0
        %547 = vmatpush1.msra.mxu0 0.0
        %548 = vmatprep.subr.mxu0 0.0
        %549 = vmatpush1.msra.mxu0 0.0
        %550 = vmatprep.subr.mxu0 0.0
        %551 = vmatpush1.msra.mxu0 0.0
        %552 = vmatprep.subr.mxu0 0.0
        %553 = vmatpush1.msra.mxu0 0.0
        %554 = vmatprep.subr.mxu0 0.0
        %555 = vmatpush1.msra.mxu0 0.0
        %556 = vmatprep.subr.mxu0 0.0
        %557 = vmatpush1.msra.mxu0 0.0
        %558 = vmatprep.subr.mxu0 0.0
        %559 = vmatpush1.msra.mxu0 0.0
        %560 = vmatprep.subr.mxu0 0.0
        %561 = vmatpush1.msra.mxu0 0.0
        %562 = vmatprep.subr.mxu0 0.0
        %563 = vmatpush1.msra.mxu0 0.0
        %564 = vmatprep.subr.mxu0 0.0
        %565 = vmatpush1.msra.mxu0 0.0
        %566 = vmatprep.subr.mxu0 0.0
        %567 = vmatpush1.msra.mxu0 0.0
        %568 = vmatprep.subr.mxu0 0.0
        %569 = vmatpush1.msra.mxu0 0.0
        %570 = vmatprep.subr.mxu0 0.0
        %571 = vmatpush1.msra.mxu0 0.0
        %572 = vmatprep.subr.mxu0 0.0
        %573 = vmatpush1.msra.mxu0 0.0
        %574 = vmatprep.subr.mxu0 0.0
        %575 = vmatpush1.msra.mxu0 0.0
        %576 = vmatprep.subr.mxu0 0.0
        %577 = vmatpush1.msra.mxu0 0.0
        %578 = vmatprep.subr.mxu0 0.0
        %579 = vmatpush1.msra.mxu0 0.0
        %580 = vmatprep.subr.mxu0 0.0
        %581 = vmatpush1.msra.mxu0 0.0
        %582 = vmatprep.subr.mxu0 0.0
        %583 = vmatpush1.msra.mxu0 0.0
        %584 = vmatprep.subr.mxu0 0.0
        %585 = vmatpush1.msra.mxu0 0.0
        %586 = vmatprep.subr.mxu0 0.0
        %587 = vmatpush1.msra.mxu0 0.0
        %588 = vmatprep.subr.mxu0 0.0
        %589 = vmatpush1.msra.mxu0 0.0
        %590 = vmatprep.subr.mxu0 0.0
        %591 = vmatpush1.msra.mxu0 0.0
        %592 = vmatprep.subr.mxu0 0.0
        %593 = vmatpush1.msra.mxu0 0.0
        %594 = vmatprep.subr.mxu0 0.0
        %595 = vmatpush1.msra.mxu0 0.0
        %596 = vmatprep.subr.mxu0 0.0
        %597 = vmatpush1.msra.mxu0 0.0
        %598 = vmatprep.subr.mxu0 0.0
        %599 = vmatpush1.msra.mxu0 0.0
        %600 = vmatprep.subr.mxu0 0.0
        %601 = vmatpush1.msra.mxu0 0.0
        %602 = vmatprep.subr.mxu0 0.0
        %603 = vmatpush1.msra.mxu0 0.0
        %604 = vmatprep.mubr.f32.mxu0 0.0
        %605 = vmatmul.mubr.f32.gmra.mrb[0].mxu0 %v357
        %v606 = vpop.f32.mrb[0].mxu0
        %v607 = vadd.f32 %v330, %v606
        %v608 = vpop.f32.mrb[0].mxu0
        %v609 = vadd.f32 %v332, %v608
        %610 = vmatprep.mubr.f32.mxu0 0.0
        %611 = vmatmul.mubr.f32.gmra.mrb[0].mxu0 %v360
        %v612 = vpop.f32.mrb[0].mxu0
        %v613 = vadd.f32 %v336, %v612
        %v614 = vpop.f32.mrb[0].mxu0
        %v615 = vadd.f32 %v338, %v614
        %616 = vdwg.mxu0
        %v617 = vmax.f32 %v341, %v607
        %v618 = vmax.f32 %v341, %v609
        %v619 = vmax.f32 %v341, %v613
        %v620 = vmax.f32 %v341, %v615
        %v621 = vmin.f32 %v346, %v617
        %v622 = vmin.f32 %v346, %v618
        %v623 = vmin.f32 %v346, %v619
        %v624 = vmin.f32 %v346, %v620
        %v625 = vsub.f32 %v607, %v621
        %v626 = vsub.f32 %v609, %v622
        %v627 = vsub.f32 %v613, %v623
        %v628 = vsub.f32 %v615, %v624
        %629 = vmatprep.subr.mxu0 %v626
        %630 = vmatpush1.msra.mxu0 %v625
        %631 = vmatprep.subr.mxu0 %v628
        %632 = vmatpush1.msra.mxu0 %v627
        %633 = vmatprep.subr.mxu0 0.0
        %634 = vmatpush1.msra.mxu0 0.0
        %635 = vmatprep.subr.mxu0 0.0
        %636 = vmatpush1.msra.mxu0 0.0
        %637 = vmatprep.subr.mxu0 0.0
        %638 = vmatpush1.msra.mxu0 0.0
        %639 = vmatprep.subr.mxu0 0.0
        %640 = vmatpush1.msra.mxu0 0.0
        %641 = vmatprep.subr.mxu0 0.0
        %642 = vmatpush1.msra.mxu0 0.0
        %643 = vmatprep.subr.mxu0 0.0
        %644 = vmatpush1.msra.mxu0 0.0
        %645 = vmatprep.subr.mxu0 0.0
        %646 = vmatpush1.msra.mxu0 0.0
        %647 = vmatprep.subr.mxu0 0.0
        %648 = vmatpush1.msra.mxu0 0.0
        %649 = vmatprep.subr.mxu0 0.0
        %650 = vmatpush1.msra.mxu0 0.0
        %651 = vmatprep.subr.mxu0 0.0
        %652 = vmatpush1.msra.mxu0 0.0
        %653 = vmatprep.subr.mxu0 0.0
        %654 = vmatpush1.msra.mxu0 0.0
        %655 = vmatprep.subr.mxu0 0.0
        %656 = vmatpush1.msra.mxu0 0.0
        %657 = vmatprep.subr.mxu0 0.0
        %658 = vmatpush1.msra.mxu0 0.0
        %659 = vmatprep.subr.mxu0 0.0
        %660 = vmatpush1.msra.mxu0 0.0
        %661 = vmatprep.subr.mxu0 0.0
        %662 = vmatpush1.msra.mxu0 0.0
        %663 = vmatprep.subr.mxu0 0.0
        %664 = vmatpush1.msra.mxu0 0.0
        %665 = vmatprep.subr.mxu0 0.0
        %666 = vmatpush1.msra.mxu0 0.0
        %667 = vmatprep.subr.mxu0 0.0
        %668 = vmatpush1.msra.mxu0 0.0
        %669 = vmatprep.subr.mxu0 0.0
        %670 = vmatpush1.msra.mxu0 0.0
        %671 = vmatprep.subr.mxu0 0.0
        %672 = vmatpush1.msra.mxu0 0.0
        %673 = vmatprep.subr.mxu0 0.0
        %674 = vmatpush1.msra.mxu0 0.0
        %675 = vmatprep.subr.mxu0 0.0
        %676 = vmatpush1.msra.mxu0 0.0
        %677 = vmatprep.subr.mxu0 0.0
        %678 = vmatpush1.msra.mxu0 0.0
        %679 = vmatprep.subr.mxu0 0.0
        %680 = vmatpush1.msra.mxu0 0.0
        %681 = vmatprep.subr.mxu0 0.0
        %682 = vmatpush1.msra.mxu0 0.0
        %683 = vmatprep.subr.mxu0 0.0
        %684 = vmatpush1.msra.mxu0 0.0
        %685 = vmatprep.subr.mxu0 0.0
        %686 = vmatpush1.msra.mxu0 0.0
        %687 = vmatprep.subr.mxu0 0.0
        %688 = vmatpush1.msra.mxu0 0.0
        %689 = vmatprep.subr.mxu0 0.0
        %690 = vmatpush1.msra.mxu0 0.0
        %691 = vmatprep.subr.mxu0 0.0
        %692 = vmatpush1.msra.mxu0 0.0
        %693 = vmatprep.mubr.f32.mxu0 0.0
        %694 = vmatmul.mubr.f32.gmra.mrb[0].mxu0 %v357
        %v695 = vpop.f32.mrb[0].mxu0
        %v696 = vadd.f32 %v330, %v695
        %v697 = vpop.f32.mrb[0].mxu0
        %v698 = vadd.f32 %v332, %v697
        %699 = vmatprep.mubr.f32.mxu0 0.0
        %700 = vmatmul.mubr.f32.gmra.mrb[0].mxu0 %v360
        %v701 = vpop.f32.mrb[0].mxu0
        %v702 = vadd.f32 %v336, %v701
        %v703 = vpop.f32.mrb[0].mxu0
        %v704 = vadd.f32 %v338, %v703
        %705 = vdwg.mxu0
        %v706 = vmax.f32 %v341, %v696
        %v707 = vmax.f32 %v341, %v698
        %v708 = vmax.f32 %v341, %v702
        %v709 = vmax.f32 %v341, %v704
        %v710 = vmin.f32 %v346, %v706
        %v711 = vmin.f32 %v346, %v707
        %v712 = vmin.f32 %v346, %v708
        %v713 = vmin.f32 %v346, %v709
        %v714 = vsub.f32 %v696, %v710
        %v715 = vsub.f32 %v698, %v711
        %v716 = vsub.f32 %v702, %v712
        %v717 = vsub.f32 %v704, %v713
        %718 = vst [vmem:[%s231] sm:$0xff] %v714
        %719 = vst [vmem:[%s231 + $0x8] sm:$0xff] %v715
        %720 = vst [vmem:[%s231 + $0x10] sm:$0xff] %v716
        %721 = vst [vmem:[%s231 + $0x18] sm:$0xff] %v717
        %s722 = sand.u32 %s133, 1
        %s723 = scalar_lea.sflag [#allocation5], %s722
        %s724 = sand.u32 %s133, 1
        %s725 = smul.addr %s724, 32
        %s726 = scalar_lea.vmem [#allocation6], %s725
        // Predicated region
        $region41: #{tpu_custom_call.1} parent=35 // pred_check
          %p727 = pneg %p143
        $region42: #{tpu_custom_call.1} parent=35 // pred_check_branch
          %729 = sbr.rel (%p727) target = $region44
        $region43: #{tpu_custom_call.1} parent=35 // pred_region
          %s730 = smul.u32 2, %s25
          %s732 = ssub.s32 512, 512
          %733 = vsyncadd %s723, %s732
          %s734 = smul.addr %s24, 4
          %s735 = sadd.s32 %s730, %s734
          %s736 = smul.addr %s735, 128
          %s737 = scalar_lea.hbm %s4, %s736
          %s738 = sshll.u32 %s726, 4
          %s739 = int_to_ptr.vmem [resolvable:$true] %s738
          %744 = dma.vmem_to_hbm [thread:$0]  %s739, 512, %s737, %s723, 256, 256, 16
        $region44: #{tpu_custom_call.1} parent=35 // pred_fallthru
          _
      $region36: #{tpu_custom_call.1} parent=5 // pred_fallthru
        _
      %p745 = scmp.le.s32.totalorder 2, %s15
      // Predicated region
      $region45: #{tpu_custom_call.1} parent=5 // pred_check
        %p746 = pneg %p745
      $region46: #{tpu_custom_call.1} parent=5 // pred_check_branch
        %748 = sbr.rel (%p746) target = $region48
      $region47: #{tpu_custom_call.1} parent=5 // pred_region
        %s749 = ssub.s32 %s15, 2
        // Predicated region
        $region49: #{tpu_custom_call.1} parent=47 // pred_check
          %p750 = pneg %p149
        $region50: #{tpu_custom_call.1} parent=47 // pred_check_branch
          %752 = sbr.rel (%p750) target = $region52
        $region51: #{tpu_custom_call.1} parent=47 // pred_region
          %s753 = sand.u32 %s134, 1
          %s754 = scalar_lea.sflag [#allocation5], %s753
          %s755 = sand.u32 %s134, 1
          %s756 = smul.addr %s755, 32
          %s757 = scalar_lea.vmem [#allocation6], %s756
          %758 = dma.done %s754, 512
        $region52: #{tpu_custom_call.1} parent=47 // pred_fallthru
          _
      $region48: #{tpu_custom_call.1} parent=5 // pred_fallthru
        _
    $region6: #{tpu_custom_call.1} parent=1 // loop_footer
      %s19 = sadd.s32 1, %s15
    $region7: #{tpu_custom_call.1} parent=1 // loop_footer_branch
      %14 = sbr.rel target = $region3
    $region8: #{tpu_custom_call.1} parent=1 // loop_exit
      _
    %759 = vsyncpa [#allocation4], 1
    %s760 = scalar_lea.sflag [#allocation4], 1
    %761 = vsyncpa %s760, 1
    %762 = vsyncpa [#allocation5], 1
    %s763 = scalar_lea.sflag [#allocation5], 1
    %764 = vsyncpa %s763, 1

</llo_original>
